<compile_context>
chip_gen: v7x
topology: tpu7x:2x2x1
jax: 0.10.0
libtpu: 0.0.40
codegen_flags: <defaults>
</compile_context>

<pallas_src>
import jax
import jax.numpy as jnp
from jax.experimental import pallas as pl
from jax.experimental.pallas import tpu as pltpu

NOTES_IN, PHYSI_IN, VITAL_IN = 768, 76, 128
OUT_LANES = 128  # classifier columns padded to a full lane tile (lane-dense store)


def _round_up(x, m):
    return (x + m - 1) // m * m


def _fused_kernel(notes_ref, physi_ref, vital_ref,
                  wn_ref, wp_ref, wv_ref, bh_ref,
                  wc_ref, bc_ref,
                  out_ref):
    # Activations arrive in f32 (no wrapper-side cast/pad pass); cast to bf16
    # on the VPU right before each dot -- a few hundred cycles, fully hidden
    # under the input DMA.  All matmuls accumulate in f32.
    cd = wn_ref.dtype
    # Block-diagonal fused hidden: each zero-padded weight slab writes only its
    # own column slot of the Hpad-wide hidden, so summing the three dots IS the
    # concat of the per-modality projections (never materialized).
    h = jnp.dot(notes_ref[...].astype(cd), wn_ref[...],
                preferred_element_type=jnp.float32)
    h += jnp.dot(physi_ref[...].astype(cd), wp_ref[...],
                 preferred_element_type=jnp.float32)
    h += jnp.dot(vital_ref[...].astype(cd), wv_ref[...],
                 preferred_element_type=jnp.float32)
    h = jnp.tanh(h + bh_ref[...])
    # TODO(synk): Dropout(p=0.3) is eval-mode identity here (inference forward).
    out = jnp.dot(h.astype(cd), wc_ref[...],
                  preferred_element_type=jnp.float32) + bc_ref[...]
    out_ref[...] = out.astype(out_ref.dtype)


def init_params(key, notes_hidden, physi_hidden, vital_hidden, n_classes):
    """Raw (torch-equivalent) params, stored [in, out] / [1, out]."""
    ks = jax.random.split(key, 8)

    def lin(kw, kb, fan_in, fan_out):
        w = jax.random.normal(kw, (fan_in, fan_out), jnp.float32) * 0.02
        b = jax.random.normal(kb, (1, fan_out), jnp.float32) * 0.02
        return w, b

    wn, bn = lin(ks[0], ks[1], NOTES_IN, notes_hidden)
    wp, bp = lin(ks[2], ks[3], PHYSI_IN, physi_hidden)
    wv, bv = lin(ks[4], ks[5], VITAL_IN, vital_hidden)
    wc, bc = lin(ks[6], ks[7], notes_hidden + physi_hidden + vital_hidden,
                 n_classes)
    return dict(wn=wn, bn=bn, wp=wp, bp=bp, wv=wv, bv=bv, wc=wc, bc=bc)


def pack_params(params, *, compute_dtype=jnp.bfloat16):
    """Pack raw params into padded, block-diagonal, MXU/lane-friendly weights."""
    wn, bn = params["wn"], params["bn"]
    wp, bp = params["wp"], params["bp"]
    wv, bv = params["wv"], params["bv"]
    wc, bc = params["wc"], params["bc"]
    nh, ph, vh = wn.shape[1], wp.shape[1], wv.shape[1]
    th = nh + ph + vh
    n_classes = wc.shape[1]
    hpad = _round_up(th, 128)  # hidden lives on the lane axis

    def slot(w, col_off):
        out = jnp.zeros((w.shape[0], hpad), jnp.float32)
        out = out.at[:, col_off: col_off + w.shape[1]].set(w)
        return out.astype(compute_dtype)

    wn_p = slot(wn, 0)
    wp_p = slot(wp, nh)          # kept at 76 rows; Mosaic zero-pads K for the dot
    wv_p = slot(wv, nh + ph)
    bh = jnp.zeros((1, hpad), jnp.float32).at[:, :th].set(
        jnp.concatenate([bn, bp, bv], axis=-1))
    # Classifier packed lane-dense (128 output lanes) so the kernel's output
    # store is unmasked; extra columns are exact zeros and sliced off outside.
    wc_p = jnp.zeros((hpad, OUT_LANES), jnp.float32).at[:th, :n_classes].set(wc)
    bc_p = jnp.zeros((1, OUT_LANES), jnp.float32).at[:, :n_classes].set(bc)
    return dict(wn=wn_p, wp=wp_p, wv=wv_p, bh=bh,
                wc=wc_p.astype(compute_dtype), bc=bc_p)


def all_model_forward(notes, physi, vital, packed, n_classes, *, block_b=None):
    """Fused AllModel forward. notes [B,768] f32, physi [B,76] f32, vital [B,128] f32."""
    B = notes.shape[0]
    assert physi.shape[0] == B and vital.shape[0] == B
    assert notes.shape[1] == NOTES_IN
    assert physi.shape[1] == PHYSI_IN
    assert vital.shape[1] == VITAL_IN

    wn, wp, wv = packed["wn"], packed["wp"], packed["wv"]
    bh, wc, bc = packed["bh"], packed["wc"], packed["bc"]

    # Batch-tile selection: HBM-bound kernel, so make tiles big to amortize the
    # ~0.35us/step pipeline overhead.  No forced 2-way split for small batches
    # (v5e/v6e are single-TC, and at these sizes a split is pure overhead); for
    # large batches use an even step count so dimension_semantics=("parallel",)
    # can shard across v7x's two TensorCores.
    CAP = 2048
    if block_b is None:
        if B <= CAP:
            block_b = B if (B % 8 == 0 or B < 8) else (B // 8) * 8
        else:
            steps = pl.cdiv(B, CAP)
            steps += steps % 2                     # even step count (megacore)
            block_b = _round_up(pl.cdiv(B, steps), 8)
    else:
        block_b = min(block_b, B)
        if block_b < B:
            block_b = max(8, (block_b // 8) * 8)
    grid = (pl.cdiv(B, block_b),)  # partial last block handled by masked writeback

    def batch_spec(feat):
        return pl.BlockSpec((block_b, feat), lambda i: (i, 0))

    def full_spec(arr):
        return pl.BlockSpec(arr.shape, lambda i: (0,) * arr.ndim)

    # Explicit VMEM budget: double-buffered activations/output + weights with
    # ~2x headroom, capped at 48 MiB (< v7x's 64 MiB physical, leaving Mosaic
    # internal scratch room).
    in_bytes = block_b * (NOTES_IN + PHYSI_IN + VITAL_IN) * 4
    out_bytes = block_b * OUT_LANES * 4
    weight_bytes = sum(int(a.size) * a.dtype.itemsize
                       for a in (wn, wp, wv, bh, wc, bc))
    need = 2 * (in_bytes + out_bytes) + 2 * weight_bytes
    vmem_limit = int(min(48 * 2 ** 20, max(2 * need, 16 * 2 ** 20)))

    out = pl.pallas_call(
        _fused_kernel,
        out_shape=jax.ShapeDtypeStruct((B, OUT_LANES), jnp.float32),
        grid_spec=pltpu.PrefetchScalarGridSpec(
            num_scalar_prefetch=0,
            grid=grid,
            in_specs=[
                batch_spec(NOTES_IN),
                batch_spec(PHYSI_IN),
                batch_spec(VITAL_IN),
                full_spec(wn), full_spec(wp), full_spec(wv),
                full_spec(bh), full_spec(wc), full_spec(bc),
            ],
            out_specs=pl.BlockSpec((block_b, OUT_LANES), lambda i: (i, 0)),
        ),
        compiler_params=pltpu.CompilerParams(
            dimension_semantics=("parallel",),
            vmem_limit_bytes=vmem_limit),
    )(notes, physi, vital, wn, wp, wv, bh, wc, bc)
    return out[:, :n_classes]


def reference_forward(notes, physi, vital, params, *, compute_dtype=jnp.bfloat16):
    """Pure-JAX reference with the same dtype policy as the kernel."""
    cd = compute_dtype
    wn, bn = params["wn"].astype(cd), params["bn"]
    wp, bp = params["wp"].astype(cd), params["bp"]
    wv, bv = params["wv"].astype(cd), params["bv"]
    wc, bc = params["wc"].astype(cd), params["bc"]
    n = jnp.tanh(jnp.dot(notes.astype(cd), wn,
                         preferred_element_type=jnp.float32) + bn)
    p = jnp.tanh(jnp.dot(physi.astype(cd), wp,
                         preferred_element_type=jnp.float32) + bp)
    v = jnp.tanh(jnp.dot(vital.astype(cd), wv,
                         preferred_element_type=jnp.float32) + bv)
    fused = jnp.concatenate([n, p, v], axis=-1)
    return jnp.dot(fused.astype(cd), wc,
                   preferred_element_type=jnp.float32) + bc


if __name__ == "__main__":
    # config = {notes_hidden: 32, physi_hidden: 32, vital_hidden: 64,
    #           total_hidden: 128, n_classes: 8}
    B = 16
    notes_hidden, physi_hidden, vital_hidden, n_classes = 32, 32, 64, 8

    key = jax.random.PRNGKey(0)
    k_in, k_par = jax.random.split(key)
    kn, kp, kv = jax.random.split(k_in, 3)

    notes = jax.random.normal(kn, (B, NOTES_IN), jnp.float32)
    physi = jax.random.normal(kp, (B, PHYSI_IN), jnp.float32)
    vital = jax.random.normal(kv, (B, VITAL_IN), jnp.float32)

    raw = init_params(k_par, notes_hidden, physi_hidden, vital_hidden,
                      n_classes)
    packed = pack_params(raw)

    out = all_model_forward(notes, physi, vital, packed, n_classes)
    out = jax.block_until_ready(out)

    ref = reference_forward(notes, physi, vital, raw)
    assert out.shape == (B, n_classes)
    assert jnp.allclose(out, ref, atol=1e-2, rtol=1e-2), "mismatch vs reference"

    print("KERNEL_OK")
</pallas_src>

<mosaic_0001>
module attributes {stable_mosaic.version = 11 : i64} {
  func.func @_fused_kernel(%arg0: i32, %arg1: memref<16x768xf32, #tpu.memory_space<vmem>>, %arg2: memref<16x76xf32, #tpu.memory_space<vmem>>, %arg3: memref<16x128xf32, #tpu.memory_space<vmem>>, %arg4: memref<768x128xbf16, #tpu.memory_space<vmem>>, %arg5: memref<76x128xbf16, #tpu.memory_space<vmem>>, %arg6: memref<128x128xbf16, #tpu.memory_space<vmem>>, %arg7: memref<1x128xf32, #tpu.memory_space<vmem>>, %arg8: memref<128x128xbf16, #tpu.memory_space<vmem>>, %arg9: memref<1x128xf32, #tpu.memory_space<vmem>>, %arg10: memref<16x128xf32, #tpu.memory_space<vmem>>) attributes {dimension_semantics = [#tpu.dimension_semantics<parallel>], iteration_bounds = array<i64: 1>, scalar_prefetch = 0 : i64, scratch_operands = 0 : i64, tpu.core_type = #tpu.core_type<tc>, window_params = [{transform_indices = @transform_0, window_bounds = array<i64: 16, 768>}, {transform_indices = @transform_1, window_bounds = array<i64: 16, 76>}, {transform_indices = @transform_2, window_bounds = array<i64: 16, 128>}, {pipeline_mode = #tpu.pipeline_mode<synchronous>, transform_indices = @transform_3, window_bounds = array<i64: 768, 128>}, {pipeline_mode = #tpu.pipeline_mode<synchronous>, transform_indices = @transform_4, window_bounds = array<i64: 76, 128>}, {pipeline_mode = #tpu.pipeline_mode<synchronous>, transform_indices = @transform_5, window_bounds = array<i64: 128, 128>}, {pipeline_mode = #tpu.pipeline_mode<synchronous>, transform_indices = @transform_6, window_bounds = array<i64: 1, 128>}, {pipeline_mode = #tpu.pipeline_mode<synchronous>, transform_indices = @transform_7, window_bounds = array<i64: 128, 128>}, {pipeline_mode = #tpu.pipeline_mode<synchronous>, transform_indices = @transform_8, window_bounds = array<i64: 1, 128>}, {transform_indices = @transform_9, window_bounds = array<i64: 16, 128>}]} {
    %c0 = arith.constant 0 : index
    %c0_0 = arith.constant 0 : index
    %0 = vector.load %arg1[%c0, %c0_0] : memref<16x768xf32, #tpu.memory_space<vmem>>, vector<16x768xf32>
    %1 = arith.truncf %0 : vector<16x768xf32> to vector<16x768xbf16>
    %c0_1 = arith.constant 0 : index
    %c0_2 = arith.constant 0 : index
    %2 = vector.load %arg4[%c0_1, %c0_2] : memref<768x128xbf16, #tpu.memory_space<vmem>>, vector<768x128xbf16>
    %cst = arith.constant dense<0.000000e+00> : vector<16x128xf32>
    %3 = tpu.matmul %1, %2, %cst {dimension_numbers = #tpu.dot_dimension_numbers<[1], [0], [0], [1], [0, 0, 1, 1], [], []>} : vector<16x768xbf16>, vector<768x128xbf16>, vector<16x128xf32> -> vector<16x128xf32>
    %c0_3 = arith.constant 0 : index
    %c0_4 = arith.constant 0 : index
    %4 = vector.load %arg2[%c0_3, %c0_4] : memref<16x76xf32, #tpu.memory_space<vmem>>, vector<16x76xf32>
    %5 = arith.truncf %4 : vector<16x76xf32> to vector<16x76xbf16>
    %c0_5 = arith.constant 0 : index
    %c0_6 = arith.constant 0 : index
    %6 = vector.load %arg5[%c0_5, %c0_6] : memref<76x128xbf16, #tpu.memory_space<vmem>>, vector<76x128xbf16>
    %cst_7 = arith.constant dense<0.000000e+00> : vector<16x128xf32>
    %7 = tpu.matmul %5, %6, %cst_7 {dimension_numbers = #tpu.dot_dimension_numbers<[1], [0], [0], [1], [0, 0, 1, 1], [], []>} : vector<16x76xbf16>, vector<76x128xbf16>, vector<16x128xf32> -> vector<16x128xf32>
    %8 = arith.addf %3, %7 : vector<16x128xf32>
    %c0_8 = arith.constant 0 : index
    %c0_9 = arith.constant 0 : index
    %9 = vector.load %arg3[%c0_8, %c0_9] : memref<16x128xf32, #tpu.memory_space<vmem>>, vector<16x128xf32>
    %10 = arith.truncf %9 : vector<16x128xf32> to vector<16x128xbf16>
    %c0_10 = arith.constant 0 : index
    %c0_11 = arith.constant 0 : index
    %11 = vector.load %arg6[%c0_10, %c0_11] : memref<128x128xbf16, #tpu.memory_space<vmem>>, vector<128x128xbf16>
    %cst_12 = arith.constant dense<0.000000e+00> : vector<16x128xf32>
    %12 = tpu.matmul %10, %11, %cst_12 {dimension_numbers = #tpu.dot_dimension_numbers<[1], [0], [0], [1], [0, 0, 1, 1], [], []>} : vector<16x128xbf16>, vector<128x128xbf16>, vector<16x128xf32> -> vector<16x128xf32>
    %13 = arith.addf %8, %12 : vector<16x128xf32>
    %c0_13 = arith.constant 0 : index
    %c0_14 = arith.constant 0 : index
    %14 = vector.load %arg7[%c0_13, %c0_14] : memref<1x128xf32, #tpu.memory_space<vmem>>, vector<1x128xf32>
    %15 = vector.broadcast %14 : vector<1x128xf32> to vector<16x128xf32>
    %16 = arith.addf %13, %15 : vector<16x128xf32>
    %17 = math.tanh %16 : vector<16x128xf32>
    %18 = arith.truncf %17 : vector<16x128xf32> to vector<16x128xbf16>
    %c0_15 = arith.constant 0 : index
    %c0_16 = arith.constant 0 : index
    %19 = vector.load %arg8[%c0_15, %c0_16] : memref<128x128xbf16, #tpu.memory_space<vmem>>, vector<128x128xbf16>
    %cst_17 = arith.constant dense<0.000000e+00> : vector<16x128xf32>
    %20 = tpu.matmul %18, %19, %cst_17 {dimension_numbers = #tpu.dot_dimension_numbers<[1], [0], [0], [1], [0, 0, 1, 1], [], []>} : vector<16x128xbf16>, vector<128x128xbf16>, vector<16x128xf32> -> vector<16x128xf32>
    %c0_18 = arith.constant 0 : index
    %c0_19 = arith.constant 0 : index
    %21 = vector.load %arg9[%c0_18, %c0_19] : memref<1x128xf32, #tpu.memory_space<vmem>>, vector<1x128xf32>
    %22 = vector.broadcast %21 : vector<1x128xf32> to vector<16x128xf32>
    %23 = arith.addf %20, %22 : vector<16x128xf32>
    %c0_20 = arith.constant 0 : index
    %c0_21 = arith.constant 0 : index
    %24 = vector.load %arg10[%c0_20, %c0_21] : memref<16x128xf32, #tpu.memory_space<vmem>>, vector<16x128xf32>
    tpu.vector_store %arg10[%c0_20, %c0_21], %23 {strides = array<i32>} : memref<16x128xf32, #tpu.memory_space<vmem>>, vector<16x128xf32>,
    return
  }
  func.func @transform_0(%arg0: i32) -> (i32, i32) {
    %c0_i32 = arith.constant 0 : i32
    %c0_i32_0 = arith.constant 0 : i32
    return %arg0, %c0_i32 : i32, i32
  }
  func.func @transform_1(%arg0: i32) -> (i32, i32) {
    %c0_i32 = arith.constant 0 : i32
    %c0_i32_0 = arith.constant 0 : i32
    return %arg0, %c0_i32 : i32, i32
  }
  func.func @transform_2(%arg0: i32) -> (i32, i32) {
    %c0_i32 = arith.constant 0 : i32
    %c0_i32_0 = arith.constant 0 : i32
    return %arg0, %c0_i32 : i32, i32
  }
  func.func @transform_3(%arg0: i32) -> (i32, i32) {
    %c0_i32 = arith.constant 0 : i32
    %c0_i32_0 = arith.constant 0 : i32
    %c0_i32_1 = arith.constant 0 : i32
    return %c0_i32, %c0_i32_0 : i32, i32
  }
  func.func @transform_4(%arg0: i32) -> (i32, i32) {
    %c0_i32 = arith.constant 0 : i32
    %c0_i32_0 = arith.constant 0 : i32
    %c0_i32_1 = arith.constant 0 : i32
    return %c0_i32, %c0_i32_0 : i32, i32
  }
  func.func @transform_5(%arg0: i32) -> (i32, i32) {
    %c0_i32 = arith.constant 0 : i32
    %c0_i32_0 = arith.constant 0 : i32
    %c0_i32_1 = arith.constant 0 : i32
    return %c0_i32, %c0_i32_0 : i32, i32
  }
  func.func @transform_6(%arg0: i32) -> (i32, i32) {
    %c0_i32 = arith.constant 0 : i32
    %c0_i32_0 = arith.constant 0 : i32
    %c0_i32_1 = arith.constant 0 : i32
    return %c0_i32, %c0_i32_0 : i32, i32
  }
  func.func @transform_7(%arg0: i32) -> (i32, i32) {
    %c0_i32 = arith.constant 0 : i32
    %c0_i32_0 = arith.constant 0 : i32
    %c0_i32_1 = arith.constant 0 : i32
    return %c0_i32, %c0_i32_0 : i32, i32
  }
  func.func @transform_8(%arg0: i32) -> (i32, i32) {
    %c0_i32 = arith.constant 0 : i32
    %c0_i32_0 = arith.constant 0 : i32
    %c0_i32_1 = arith.constant 0 : i32
    return %c0_i32, %c0_i32_0 : i32, i32
  }
  func.func @transform_9(%arg0: i32) -> (i32, i32) {
    %c0_i32 = arith.constant 0 : i32
    %c0_i32_0 = arith.constant 0 : i32
    return %arg0, %c0_i32 : i32, i32
  }
}

</mosaic_0001>

<llo_original>
// kernel: tpu_custom_call.1
$region0: #{tpu_custom_call.1}
  #allocation0 [shape = 'u32[]', space=smem, size = 0x4, offset = 0x4, fixed_abs, tag = 'smem constant byte address 0x4 - core index']
  #allocation1 [shape = 'u32[144,128]{1,0:T(1,128)}', space=vmem, size = 0x12000, scoped, tag = 'internal scratch']
  %s0 = inlined_call_operand.hbm [shape: f32[16,768], index: 0, kind: input, shape index: {}]
  %s1 = inlined_call_operand.hbm [shape: f32[16,76], index: 1, kind: input, shape index: {}]
  %s2 = inlined_call_operand.hbm [shape: f32[16,128], index: 2, kind: input, shape index: {}]
  %s3 = inlined_call_operand.hbm [shape: bf16[768,128], index: 3, kind: input, shape index: {}]
  %s4 = inlined_call_operand.hbm [shape: bf16[76,128], index: 4, kind: input, shape index: {}]
  %s5 = inlined_call_operand.hbm [shape: bf16[128,128], index: 5, kind: input, shape index: {}]
  %s6 = inlined_call_operand.vmem [shape: f32[1,128], index: 6, kind: input, shape index: {}]
  %s7 = inlined_call_operand.hbm [shape: bf16[128,128], index: 7, kind: input, shape index: {}]
  %s8 = inlined_call_operand.vmem [shape: f32[1,128], index: 8, kind: input, shape index: {}]
  %s9 = inlined_call_operand.hbm [shape: f32[16,128], index: 9, kind: output, shape index: {}]
  %s10 = sld [smem:[#allocation0]]
  $region74: #{tpu_custom_call.1} parent=0
    _
  %s12 = ssub.s32 1, %s10
  %s13 = scalar_select 0, %s12, %s10
  $region1: #{tpu_custom_call.1} parent=0
    #allocation2 [shape = 'u8[49152]{0}', space=vmem, size = 0xc000, scoped, tag = 'input window, operand 0, single buffered']
    #allocation3 [shape = 's32[1]{0}', space=sflag, size = 0x4, scoped, tag = 'scoped memory for tpu_custom_call.1']
    #allocation4 [shape = 's32[1]{0}', space=sflag, size = 0x4, scoped, tag = 'scoped memory for tpu_custom_call.1']
    #allocation5 [shape = 'u8[8192]{0}', space=vmem, size = 0x2000, scoped, tag = 'input window, operand 1, single buffered']
    #allocation6 [shape = 's32[1]{0}', space=sflag, size = 0x4, scoped, tag = 'scoped memory for tpu_custom_call.1']
    #allocation7 [shape = 'u8[8192]{0}', space=vmem, size = 0x2000, scoped, tag = 'input window, operand 2, single buffered']
    #allocation8 [shape = 'u8[196608]{0}', space=vmem, size = 0x30000, scoped, tag = 'input window, operand 3, single buffered']
    #allocation9 [shape = 's32[1]{0}', space=sflag, size = 0x4, scoped, tag = 'scoped memory for tpu_custom_call.1']
    #allocation10 [shape = 'u8[20480]{0}', space=vmem, size = 0x5000, scoped, tag = 'input window, operand 4, single buffered']
    #allocation11 [shape = 'u8[32768]{0}', space=vmem, size = 0x8000, scoped, tag = 'input window, operand 5, single buffered']
    #allocation12 [shape = 's32[1]{0}', space=sflag, size = 0x4, scoped, tag = 'scoped memory for tpu_custom_call.1']
    #allocation13 [shape = 'u8[32768]{0}', space=vmem, size = 0x8000, scoped, tag = 'input window, operand 7, single buffered']
    #allocation14 [shape = 'u8[8192]{0}', space=vmem, size = 0x2000, scoped, tag = 'output window, operand 0, single buffered']
    %14 = vsyncpa [#allocation3], 0
    %15 = vsyncpa [#allocation6], 0
    %16 = vsyncpa [#allocation9], 0
    %17 = vsyncpa [#allocation12], 0
    %18 = vsyncpa [#allocation4], 0
    // Predicated region
    $region2: #{tpu_custom_call.1} parent=1 // pred_check
      _
    $region3: #{tpu_custom_call.1} parent=1 // pred_check_branch
      %20 = sbr.rel (0) target = $region5
    $region4: #{tpu_custom_call.1} parent=1 // pred_region
      %s22 = ssub.s32 1536, 1536
      %23 = vsyncadd [#allocation3], %s22
      %s24 = sshll.u32 [#allocation2], 4
      %s25 = int_to_ptr.vmem [resolvable:$true] %s24
      %30 = dma.hbm_to_vmem [thread:$0]  %s0, 1536, %s25, [#allocation3], 768, 768, 48
    $region5: #{tpu_custom_call.1} parent=1 // pred_fallthru
      _
    // Predicated region
    $region6: #{tpu_custom_call.1} parent=1 // pred_check
      _
    $region7: #{tpu_custom_call.1} parent=1 // pred_check_branch
      %32 = sbr.rel (0) target = $region9
    $region8: #{tpu_custom_call.1} parent=1 // pred_region
      %s34 = ssub.s32 256, 256
      %35 = vsyncadd [#allocation6], %s34
      %s36 = sshll.u32 [#allocation5], 4
      %s37 = int_to_ptr.vmem [resolvable:$true] %s36
      %42 = dma.hbm_to_vmem [thread:$0]  %s1, 256, %s37, [#allocation6], 128, 128, 8
    $region9: #{tpu_custom_call.1} parent=1 // pred_fallthru
      _
    // Predicated region
    $region10: #{tpu_custom_call.1} parent=1 // pred_check
      _
    $region11: #{tpu_custom_call.1} parent=1 // pred_check_branch
      %44 = sbr.rel (0) target = $region13
    $region12: #{tpu_custom_call.1} parent=1 // pred_region
      %s46 = ssub.s32 256, 256
      %47 = vsyncadd [#allocation6], %s46
      %s48 = sshll.u32 [#allocation7], 4
      %s49 = int_to_ptr.vmem [resolvable:$true] %s48
      %54 = dma.hbm_to_vmem [thread:$0]  %s2, 256, %s49, [#allocation6], 128, 128, 8
    $region13: #{tpu_custom_call.1} parent=1 // pred_fallthru
      _
    // Predicated region
    $region14: #{tpu_custom_call.1} parent=1 // pred_check
      _
    $region15: #{tpu_custom_call.1} parent=1 // pred_check_branch
      %56 = sbr.rel (0) target = $region17
    $region16: #{tpu_custom_call.1} parent=1 // pred_region
      %s58 = ssub.s32 6144, 6144
      %59 = vsyncadd [#allocation9], %s58
      %s60 = sshll.u32 [#allocation8], 4
      %s61 = int_to_ptr.vmem [resolvable:$true] %s60
      %66 = dma.hbm_to_vmem [thread:$0]  %s3, 6144, %s61, [#allocation9], 64, 64, 4
    $region17: #{tpu_custom_call.1} parent=1 // pred_fallthru
      _
    // Predicated region
    $region18: #{tpu_custom_call.1} parent=1 // pred_check
      _
    $region19: #{tpu_custom_call.1} parent=1 // pred_check_branch
      %68 = sbr.rel (0) target = $region21
    $region20: #{tpu_custom_call.1} parent=1 // pred_region
      %s70 = ssub.s32 640, 640
      %71 = vsyncadd [#allocation9], %s70
      %s72 = sshll.u32 [#allocation10], 4
      %s73 = int_to_ptr.vmem [resolvable:$true] %s72
      %78 = dma.hbm_to_vmem [thread:$0]  %s4, 640, %s73, [#allocation9], 64, 64, 4
    $region21: #{tpu_custom_call.1} parent=1 // pred_fallthru
      _
    // Predicated region
    $region22: #{tpu_custom_call.1} parent=1 // pred_check
      _
    $region23: #{tpu_custom_call.1} parent=1 // pred_check_branch
      %80 = sbr.rel (0) target = $region25
    $region24: #{tpu_custom_call.1} parent=1 // pred_region
      %s82 = ssub.s32 1024, 1024
      %83 = vsyncadd [#allocation12], %s82
      %s84 = sshll.u32 [#allocation11], 4
      %s85 = int_to_ptr.vmem [resolvable:$true] %s84
      %90 = dma.hbm_to_vmem [thread:$0]  %s5, 1024, %s85, [#allocation12], 64, 64, 4
    $region25: #{tpu_custom_call.1} parent=1 // pred_fallthru
      _
    // Predicated region
    $region26: #{tpu_custom_call.1} parent=1 // pred_check
      _
    $region27: #{tpu_custom_call.1} parent=1 // pred_check_branch
      %92 = sbr.rel (0) target = $region29
    $region28: #{tpu_custom_call.1} parent=1 // pred_region
      _
    $region29: #{tpu_custom_call.1} parent=1 // pred_fallthru
      _
    // Predicated region
    $region30: #{tpu_custom_call.1} parent=1 // pred_check
      _
    $region31: #{tpu_custom_call.1} parent=1 // pred_check_branch
      %94 = sbr.rel (0) target = $region33
    $region32: #{tpu_custom_call.1} parent=1 // pred_region
      %s96 = ssub.s32 1024, 1024
      %97 = vsyncadd [#allocation12], %s96
      %s98 = sshll.u32 [#allocation13], 4
      %s99 = int_to_ptr.vmem [resolvable:$true] %s98
      %104 = dma.hbm_to_vmem [thread:$0]  %s7, 1024, %s99, [#allocation12], 64, 64, 4
    $region33: #{tpu_custom_call.1} parent=1 // pred_fallthru
      _
    // Predicated region
    $region34: #{tpu_custom_call.1} parent=1 // pred_check
      _
    $region35: #{tpu_custom_call.1} parent=1 // pred_check_branch
      %106 = sbr.rel (0) target = $region37
    $region36: #{tpu_custom_call.1} parent=1 // pred_region
      _
    $region37: #{tpu_custom_call.1} parent=1 // pred_fallthru
      _
    // Predicated region
    $region38: #{tpu_custom_call.1} parent=1 // pred_check
      _
    $region39: #{tpu_custom_call.1} parent=1 // pred_check_branch
      %108 = sbr.rel (0) target = $region41
    $region40: #{tpu_custom_call.1} parent=1 // pred_region
      %109 = dma.done [#allocation3], 1536
    $region41: #{tpu_custom_call.1} parent=1 // pred_fallthru
      _
    // Predicated region
    $region42: #{tpu_custom_call.1} parent=1 // pred_check
      _
    $region43: #{tpu_custom_call.1} parent=1 // pred_check_branch
      %111 = sbr.rel (0) target = $region45
    $region44: #{tpu_custom_call.1} parent=1 // pred_region
      %112 = dma.done [#allocation6], 256
    $region45: #{tpu_custom_call.1} parent=1 // pred_fallthru
      _
    // Predicated region
    $region46: #{tpu_custom_call.1} parent=1 // pred_check
      _
    $region47: #{tpu_custom_call.1} parent=1 // pred_check_branch
      %114 = sbr.rel (0) target = $region49
    $region48: #{tpu_custom_call.1} parent=1 // pred_region
      %115 = dma.done [#allocation6], 256
    $region49: #{tpu_custom_call.1} parent=1 // pred_fallthru
      _
    // Predicated region
    $region50: #{tpu_custom_call.1} parent=1 // pred_check
      _
    $region51: #{tpu_custom_call.1} parent=1 // pred_check_branch
      %117 = sbr.rel (0) target = $region53
    $region52: #{tpu_custom_call.1} parent=1 // pred_region
      %118 = dma.done [#allocation9], 6144
    $region53: #{tpu_custom_call.1} parent=1 // pred_fallthru
      _
    // Predicated region
    $region54: #{tpu_custom_call.1} parent=1 // pred_check
      _
    $region55: #{tpu_custom_call.1} parent=1 // pred_check_branch
      %120 = sbr.rel (0) target = $region57
    $region56: #{tpu_custom_call.1} parent=1 // pred_region
      %121 = dma.done [#allocation9], 640
    $region57: #{tpu_custom_call.1} parent=1 // pred_fallthru
      _
    // Predicated region
    $region58: #{tpu_custom_call.1} parent=1 // pred_check
      _
    $region59: #{tpu_custom_call.1} parent=1 // pred_check_branch
      %123 = sbr.rel (0) target = $region61
    $region60: #{tpu_custom_call.1} parent=1 // pred_region
      %124 = dma.done [#allocation12], 1024
    $region61: #{tpu_custom_call.1} parent=1 // pred_fallthru
      _
    // Predicated region
    $region62: #{tpu_custom_call.1} parent=1 // pred_check
      _
    $region63: #{tpu_custom_call.1} parent=1 // pred_check_branch
      %126 = sbr.rel (0) target = $region65
    $region64: #{tpu_custom_call.1} parent=1 // pred_region
      %127 = dma.done [#allocation12], 1024
    $region65: #{tpu_custom_call.1} parent=1 // pred_fallthru
      _
    %v129 = vld [vmem:[#allocation2] sm:$0xff]
    %v130 = vld [vmem:[#allocation2 + $0x8] sm:$0xff]
    %v131 = vld [vmem:[#allocation2 + $0x10] sm:$0xff]
    %v132 = vld [vmem:[#allocation2 + $0x18] sm:$0xff]
    %v133 = vld [vmem:[#allocation2 + $0x20] sm:$0xff]
    %v134 = vld [vmem:[#allocation2 + $0x28] sm:$0xff]
    %v135 = vld [vmem:[#allocation2 + $0x30] sm:$0xff]
    %v136 = vld [vmem:[#allocation2 + $0x38] sm:$0xff]
    %v137 = vld [vmem:[#allocation2 + $0x40] sm:$0xff]
    %v138 = vld [vmem:[#allocation2 + $0x48] sm:$0xff]
    %v139 = vld [vmem:[#allocation2 + $0x50] sm:$0xff]
    %v140 = vld [vmem:[#allocation2 + $0x58] sm:$0xff]
    %v141 = vpack.c.bf16 %v135, %v129
    %v142 = vpack.c.bf16 %v136, %v130
    %v143 = vpack.c.bf16 %v137, %v131
    %v144 = vpack.c.bf16 %v138, %v132
    %v145 = vpack.c.bf16 %v139, %v133
    %v146 = vpack.c.bf16 %v140, %v134
    %v147 = vld [vmem:[#allocation8] sm:$0xf]
    %v148 = vld [vmem:[#allocation8 + $0x4] sm:$0xf]
    %v149 = vld [vmem:[#allocation8 + $0x8] sm:$0xf]
    %v150 = vld [vmem:[#allocation8 + $0xc] sm:$0xf]
    %v151 = vld [vmem:[#allocation8 + $0x10] sm:$0xf]
    %v152 = vld [vmem:[#allocation8 + $0x14] sm:$0xf]
    %v153 = vld [vmem:[#allocation8 + $0x18] sm:$0xf]
    %v154 = vld [vmem:[#allocation8 + $0x1c] sm:$0xf]
    %v155 = vld [vmem:[#allocation8 + $0x20] sm:$0xf]
    %v156 = vld [vmem:[#allocation8 + $0x24] sm:$0xf]
    %v157 = vld [vmem:[#allocation8 + $0x28] sm:$0xf]
    %v158 = vld [vmem:[#allocation8 + $0x2c] sm:$0xf]
    %v159 = vld [vmem:[#allocation8 + $0x30] sm:$0xf]
    %v160 = vld [vmem:[#allocation8 + $0x34] sm:$0xf]
    %v161 = vld [vmem:[#allocation8 + $0x38] sm:$0xf]
    %v162 = vld [vmem:[#allocation8 + $0x3c] sm:$0xf]
    %v163 = vld [vmem:[#allocation8 + $0x40] sm:$0xf]
    %v164 = vld [vmem:[#allocation8 + $0x44] sm:$0xf]
    %v165 = vld [vmem:[#allocation8 + $0x48] sm:$0xf]
    %v166 = vld [vmem:[#allocation8 + $0x4c] sm:$0xf]
    %v167 = vld [vmem:[#allocation8 + $0x50] sm:$0xf]
    %v168 = vld [vmem:[#allocation8 + $0x54] sm:$0xf]
    %v169 = vld [vmem:[#allocation8 + $0x58] sm:$0xf]
    %v170 = vld [vmem:[#allocation8 + $0x5c] sm:$0xf]
    %v171 = vld [vmem:[#allocation8 + $0x60] sm:$0xf]
    %v172 = vld [vmem:[#allocation8 + $0x64] sm:$0xf]
    %v173 = vld [vmem:[#allocation8 + $0x68] sm:$0xf]
    %v174 = vld [vmem:[#allocation8 + $0x6c] sm:$0xf]
    %v175 = vld [vmem:[#allocation8 + $0x70] sm:$0xf]
    %v176 = vld [vmem:[#allocation8 + $0x74] sm:$0xf]
    %v177 = vld [vmem:[#allocation8 + $0x78] sm:$0xf]
    %v178 = vld [vmem:[#allocation8 + $0x7c] sm:$0xf]
    %v179 = vld [vmem:[#allocation8 + $0x80] sm:$0xf]
    %v180 = vld [vmem:[#allocation8 + $0x84] sm:$0xf]
    %v181 = vld [vmem:[#allocation8 + $0x88] sm:$0xf]
    %v182 = vld [vmem:[#allocation8 + $0x8c] sm:$0xf]
    %v183 = vld [vmem:[#allocation8 + $0x90] sm:$0xf]
    %v184 = vld [vmem:[#allocation8 + $0x94] sm:$0xf]
    %v185 = vld [vmem:[#allocation8 + $0x98] sm:$0xf]
    %v186 = vld [vmem:[#allocation8 + $0x9c] sm:$0xf]
    %v187 = vld [vmem:[#allocation8 + $0xa0] sm:$0xf]
    %v188 = vld [vmem:[#allocation8 + $0xa4] sm:$0xf]
    %v189 = vld [vmem:[#allocation8 + $0xa8] sm:$0xf]
    %v190 = vld [vmem:[#allocation8 + $0xac] sm:$0xf]
    %v191 = vld [vmem:[#allocation8 + $0xb0] sm:$0xf]
    %v192 = vld [vmem:[#allocation8 + $0xb4] sm:$0xf]
    %v193 = vld [vmem:[#allocation8 + $0xb8] sm:$0xf]
    %v194 = vld [vmem:[#allocation8 + $0xbc] sm:$0xf]
    %v195 = vld [vmem:[#allocation8 + $0xc0] sm:$0xf]
    %v196 = vld [vmem:[#allocation8 + $0xc4] sm:$0xf]
    %v197 = vld [vmem:[#allocation8 + $0xc8] sm:$0xf]
    %v198 = vld [vmem:[#allocation8 + $0xcc] sm:$0xf]
    %v199 = vld [vmem:[#allocation8 + $0xd0] sm:$0xf]
    %v200 = vld [vmem:[#allocation8 + $0xd4] sm:$0xf]
    %v201 = vld [vmem:[#allocation8 + $0xd8] sm:$0xf]
    %v202 = vld [vmem:[#allocation8 + $0xdc] sm:$0xf]
    %v203 = vld [vmem:[#allocation8 + $0xe0] sm:$0xf]
    %v204 = vld [vmem:[#allocation8 + $0xe4] sm:$0xf]
    %v205 = vld [vmem:[#allocation8 + $0xe8] sm:$0xf]
    %v206 = vld [vmem:[#allocation8 + $0xec] sm:$0xf]
    %v207 = vld [vmem:[#allocation8 + $0xf0] sm:$0xf]
    %v208 = vld [vmem:[#allocation8 + $0xf4] sm:$0xf]
    %v209 = vld [vmem:[#allocation8 + $0xf8] sm:$0xf]
    %v210 = vld [vmem:[#allocation8 + $0xfc] sm:$0xf]
    %v211 = vld [vmem:[#allocation8 + $0x100] sm:$0xf]
    %v212 = vld [vmem:[#allocation8 + $0x104] sm:$0xf]
    %v213 = vld [vmem:[#allocation8 + $0x108] sm:$0xf]
    %v214 = vld [vmem:[#allocation8 + $0x10c] sm:$0xf]
    %v215 = vld [vmem:[#allocation8 + $0x110] sm:$0xf]
    %v216 = vld [vmem:[#allocation8 + $0x114] sm:$0xf]
    %v217 = vld [vmem:[#allocation8 + $0x118] sm:$0xf]
    %v218 = vld [vmem:[#allocation8 + $0x11c] sm:$0xf]
    %v219 = vld [vmem:[#allocation8 + $0x120] sm:$0xf]
    %v220 = vld [vmem:[#allocation8 + $0x124] sm:$0xf]
    %v221 = vld [vmem:[#allocation8 + $0x128] sm:$0xf]
    %v222 = vld [vmem:[#allocation8 + $0x12c] sm:$0xf]
    %v223 = vld [vmem:[#allocation8 + $0x130] sm:$0xf]
    %v224 = vld [vmem:[#allocation8 + $0x134] sm:$0xf]
    %v225 = vld [vmem:[#allocation8 + $0x138] sm:$0xf]
    %v226 = vld [vmem:[#allocation8 + $0x13c] sm:$0xf]
    %v227 = vld [vmem:[#allocation8 + $0x140] sm:$0xf]
    %v228 = vld [vmem:[#allocation8 + $0x144] sm:$0xf]
    %v229 = vld [vmem:[#allocation8 + $0x148] sm:$0xf]
    %v230 = vld [vmem:[#allocation8 + $0x14c] sm:$0xf]
    %v231 = vld [vmem:[#allocation8 + $0x150] sm:$0xf]
    %v232 = vld [vmem:[#allocation8 + $0x154] sm:$0xf]
    %v233 = vld [vmem:[#allocation8 + $0x158] sm:$0xf]
    %v234 = vld [vmem:[#allocation8 + $0x15c] sm:$0xf]
    %v235 = vld [vmem:[#allocation8 + $0x160] sm:$0xf]
    %v236 = vld [vmem:[#allocation8 + $0x164] sm:$0xf]
    %v237 = vld [vmem:[#allocation8 + $0x168] sm:$0xf]
    %v238 = vld [vmem:[#allocation8 + $0x16c] sm:$0xf]
    %v239 = vld [vmem:[#allocation8 + $0x170] sm:$0xf]
    %v240 = vld [vmem:[#allocation8 + $0x174] sm:$0xf]
    %v241 = vld [vmem:[#allocation8 + $0x178] sm:$0xf]
    %v242 = vld [vmem:[#allocation8 + $0x17c] sm:$0xf]
    %v243 = vld [vmem:[#allocation5] sm:$0xff]
    %v244 = vld [vmem:[#allocation5 + $0x8] sm:$0xff]
    %v245 = vpack.c.bf16 %v244, %v243
    %v246 = vld [vmem:[#allocation10] sm:$0xf]
    %v247 = vld [vmem:[#allocation10 + $0x4] sm:$0xf]
    %v248 = vld [vmem:[#allocation10 + $0x8] sm:$0xf]
    %v249 = vld [vmem:[#allocation10 + $0xc] sm:$0xf]
    %v250 = vld [vmem:[#allocation10 + $0x10] sm:$0xf]
    %v251 = vld [vmem:[#allocation10 + $0x14] sm:$0xf]
    %v252 = vld [vmem:[#allocation10 + $0x18] sm:$0xf]
    %v253 = vld [vmem:[#allocation10 + $0x1c] sm:$0xf]
    %v254 = vld [vmem:[#allocation10 + $0x20] sm:$0xf]
    %v255 = vld [vmem:[#allocation10 + $0x24] sm:$0x3]
    %v266 = vunpack.c.l.b16 %v246
    %v267 = vunpack.c.l.b16 %v247
    %v268 = vunpack.c.l.b16 %v248
    %v269 = vunpack.c.l.b16 %v249
    %v270 = vunpack.c.l.b16 %v250
    %v271 = vunpack.c.l.b16 %v251
    %v272 = vunpack.c.l.b16 %v252
    %v273 = vunpack.c.l.b16 %v253
    %v274 = vunpack.c.l.b16 %v254
    %v275 = vunpack.c.l.b16 %v255
    %v276 = vpack.c.b16 %v267, %v266
    %v277 = vpack.c.b16 %v269, %v268
    %v278 = vpack.c.b16 %v271, %v270
    %v279 = vpack.c.b16 %v273, %v272
    %v280 = vpack.c.b16 %v275, %v274
    %vm285 = vcmask 621568
    %v287 = vsel %vm285, %v245, 0
    %vm289 = vcmask 1045504
    %v291 = vsel %vm289, %v280, 0
    %293 = vmatprep.subr.bf16.mxu0 0
    %294 = vmatpush1.bf16.msra.mxu0 %v276
    %295 = vmatprep.subr.bf16.mxu0 0
    %296 = vmatpush1.bf16.msra.mxu0 %v277
    %297 = vmatprep.subr.bf16.mxu0 0
    %298 = vmatpush1.bf16.msra.mxu0 %v278
    %299 = vmatprep.subr.bf16.mxu0 0
    %300 = vmatpush1.bf16.msra.mxu0 %v279
    %301 = vmatprep.subr.bf16.mxu0 0
    %302 = vmatpush1.bf16.msra.mxu0 %v291
    %303 = vmatprep.subr.bf16.mxu0 0
    %304 = vmatpush1.bf16.msra.mxu0 0
    %305 = vmatprep.subr.bf16.mxu0 0
    %306 = vmatpush1.bf16.msra.mxu0 0
    %307 = vmatprep.subr.bf16.mxu0 0
    %308 = vmatpush1.bf16.msra.mxu0 0
    %309 = vmatprep.subr.bf16.mxu0 0
    %310 = vmatpush1.bf16.msra.mxu0 0
    %311 = vmatprep.subr.bf16.mxu0 0
    %312 = vmatpush1.bf16.msra.mxu0 0
    %313 = vmatprep.subr.bf16.mxu0 0
    %314 = vmatpush1.bf16.msra.mxu0 0
    %315 = vmatprep.subr.bf16.mxu0 0
    %316 = vmatpush1.bf16.msra.mxu0 0
    %317 = vmatprep.subr.bf16.mxu0 0
    %318 = vmatpush1.bf16.msra.mxu0 0
    %319 = vmatprep.subr.bf16.mxu0 0
    %320 = vmatpush1.bf16.msra.mxu0 0
    %321 = vmatprep.subr.bf16.mxu0 0
    %322 = vmatpush1.bf16.msra.mxu0 0
    %323 = vmatprep.subr.bf16.mxu0 0
    %324 = vmatpush1.bf16.msra.mxu0 0
    %325 = vmatprep.mubr.bf16.mxu0 0
    %326 = vmatmul.mubr.bf16.gmra.mrb[0].mxu0 %v287
    %v327 = vpop.f32.mrb[0].mxu0
    %v328 = vadd.f32 0.0, %v327
    %v329 = vpop.f32.mrb[0].mxu0
    %v330 = vpop.f32.mrb[0].mxu0
    %v331 = vadd.f32 0.0, %v330
    %v332 = vpop.f32.mrb[0].mxu0
    %333 = vdwg.mxu0
    %v430 = vunpack.c.l.b16 %v147
    %v431 = vunpack.c.l.b16 %v148
    %v432 = vunpack.c.l.b16 %v149
    %v433 = vunpack.c.l.b16 %v150
    %v434 = vunpack.c.l.b16 %v151
    %v435 = vunpack.c.l.b16 %v152
    %v436 = vunpack.c.l.b16 %v153
    %v437 = vunpack.c.l.b16 %v154
    %v438 = vunpack.c.l.b16 %v155
    %v439 = vunpack.c.l.b16 %v156
    %v440 = vunpack.c.l.b16 %v157
    %v441 = vunpack.c.l.b16 %v158
    %v442 = vunpack.c.l.b16 %v159
    %v443 = vunpack.c.l.b16 %v160
    %v444 = vunpack.c.l.b16 %v161
    %v445 = vunpack.c.l.b16 %v162
    %v446 = vunpack.c.l.b16 %v163
    %v447 = vunpack.c.l.b16 %v164
    %v448 = vunpack.c.l.b16 %v165
    %v449 = vunpack.c.l.b16 %v166
    %v450 = vunpack.c.l.b16 %v167
    %v451 = vunpack.c.l.b16 %v168
    %v452 = vunpack.c.l.b16 %v169
    %v453 = vunpack.c.l.b16 %v170
    %v454 = vunpack.c.l.b16 %v171
    %v455 = vunpack.c.l.b16 %v172
    %v456 = vunpack.c.l.b16 %v173
    %v457 = vunpack.c.l.b16 %v174
    %v458 = vunpack.c.l.b16 %v175
    %v459 = vunpack.c.l.b16 %v176
    %v460 = vunpack.c.l.b16 %v177
    %v461 = vunpack.c.l.b16 %v178
    %v462 = vunpack.c.l.b16 %v179
    %v463 = vunpack.c.l.b16 %v180
    %v464 = vunpack.c.l.b16 %v181
    %v465 = vunpack.c.l.b16 %v182
    %v466 = vunpack.c.l.b16 %v183
    %v467 = vunpack.c.l.b16 %v184
    %v468 = vunpack.c.l.b16 %v185
    %v469 = vunpack.c.l.b16 %v186
    %v470 = vunpack.c.l.b16 %v187
    %v471 = vunpack.c.l.b16 %v188
    %v472 = vunpack.c.l.b16 %v189
    %v473 = vunpack.c.l.b16 %v190
    %v474 = vunpack.c.l.b16 %v191
    %v475 = vunpack.c.l.b16 %v192
    %v476 = vunpack.c.l.b16 %v193
    %v477 = vunpack.c.l.b16 %v194
    %v478 = vunpack.c.l.b16 %v195
    %v479 = vunpack.c.l.b16 %v196
    %v480 = vunpack.c.l.b16 %v197
    %v481 = vunpack.c.l.b16 %v198
    %v482 = vunpack.c.l.b16 %v199
    %v483 = vunpack.c.l.b16 %v200
    %v484 = vunpack.c.l.b16 %v201
    %v485 = vunpack.c.l.b16 %v202
    %v486 = vunpack.c.l.b16 %v203
    %v487 = vunpack.c.l.b16 %v204
    %v488 = vunpack.c.l.b16 %v205
    %v489 = vunpack.c.l.b16 %v206
    %v490 = vunpack.c.l.b16 %v207
    %v491 = vunpack.c.l.b16 %v208
    %v492 = vunpack.c.l.b16 %v209
    %v493 = vunpack.c.l.b16 %v210
    %v494 = vunpack.c.l.b16 %v211
    %v495 = vunpack.c.l.b16 %v212
    %v496 = vunpack.c.l.b16 %v213
    %v497 = vunpack.c.l.b16 %v214
    %v498 = vunpack.c.l.b16 %v215
    %v499 = vunpack.c.l.b16 %v216
    %v500 = vunpack.c.l.b16 %v217
    %v501 = vunpack.c.l.b16 %v218
    %v502 = vunpack.c.l.b16 %v219
    %v503 = vunpack.c.l.b16 %v220
    %v504 = vunpack.c.l.b16 %v221
    %v505 = vunpack.c.l.b16 %v222
    %v506 = vunpack.c.l.b16 %v223
    %v507 = vunpack.c.l.b16 %v224
    %v508 = vunpack.c.l.b16 %v225
    %v509 = vunpack.c.l.b16 %v226
    %v510 = vunpack.c.l.b16 %v227
    %v511 = vunpack.c.l.b16 %v228
    %v512 = vunpack.c.l.b16 %v229
    %v513 = vunpack.c.l.b16 %v230
    %v514 = vunpack.c.l.b16 %v231
    %v515 = vunpack.c.l.b16 %v232
    %v516 = vunpack.c.l.b16 %v233
    %v517 = vunpack.c.l.b16 %v234
    %v518 = vunpack.c.l.b16 %v235
    %v519 = vunpack.c.l.b16 %v236
    %v520 = vunpack.c.l.b16 %v237
    %v521 = vunpack.c.l.b16 %v238
    %v522 = vunpack.c.l.b16 %v239
    %v523 = vunpack.c.l.b16 %v240
    %v524 = vunpack.c.l.b16 %v241
    %v525 = vunpack.c.l.b16 %v242
    %v526 = vpack.c.b16 %v431, %v430
    %v527 = vpack.c.b16 %v433, %v432
    %v528 = vpack.c.b16 %v435, %v434
    %v529 = vpack.c.b16 %v437, %v436
    %v530 = vpack.c.b16 %v439, %v438
    %v531 = vpack.c.b16 %v441, %v440
    %v532 = vpack.c.b16 %v443, %v442
    %v533 = vpack.c.b16 %v445, %v444
    %v534 = vpack.c.b16 %v447, %v446
    %v535 = vpack.c.b16 %v449, %v448
    %v536 = vpack.c.b16 %v451, %v450
    %v537 = vpack.c.b16 %v453, %v452
    %v538 = vpack.c.b16 %v455, %v454
    %v539 = vpack.c.b16 %v457, %v456
    %v540 = vpack.c.b16 %v459, %v458
    %v541 = vpack.c.b16 %v461, %v460
    %v542 = vpack.c.b16 %v463, %v462
    %v543 = vpack.c.b16 %v465, %v464
    %v544 = vpack.c.b16 %v467, %v466
    %v545 = vpack.c.b16 %v469, %v468
    %v546 = vpack.c.b16 %v471, %v470
    %v547 = vpack.c.b16 %v473, %v472
    %v548 = vpack.c.b16 %v475, %v474
    %v549 = vpack.c.b16 %v477, %v476
    %v550 = vpack.c.b16 %v479, %v478
    %v551 = vpack.c.b16 %v481, %v480
    %v552 = vpack.c.b16 %v483, %v482
    %v553 = vpack.c.b16 %v485, %v484
    %v554 = vpack.c.b16 %v487, %v486
    %v555 = vpack.c.b16 %v489, %v488
    %v556 = vpack.c.b16 %v491, %v490
    %v557 = vpack.c.b16 %v493, %v492
    %v558 = vpack.c.b16 %v495, %v494
    %v559 = vpack.c.b16 %v497, %v496
    %v560 = vpack.c.b16 %v499, %v498
    %v561 = vpack.c.b16 %v501, %v500
    %v562 = vpack.c.b16 %v503, %v502
    %v563 = vpack.c.b16 %v505, %v504
    %v564 = vpack.c.b16 %v507, %v506
    %v565 = vpack.c.b16 %v509, %v508
    %v566 = vpack.c.b16 %v511, %v510
    %v567 = vpack.c.b16 %v513, %v512
    %v568 = vpack.c.b16 %v515, %v514
    %v569 = vpack.c.b16 %v517, %v516
    %v570 = vpack.c.b16 %v519, %v518
    %v571 = vpack.c.b16 %v521, %v520
    %v572 = vpack.c.b16 %v523, %v522
    %v573 = vpack.c.b16 %v525, %v524
    %622 = vmatprep.subr.bf16.mxu0 0
    %623 = vmatpush1.bf16.msra.mxu0 %v526
    %624 = vmatprep.subr.bf16.mxu0 0
    %625 = vmatpush1.bf16.msra.mxu0 %v527
    %626 = vmatprep.subr.bf16.mxu0 0
    %627 = vmatpush1.bf16.msra.mxu0 %v528
    %628 = vmatprep.subr.bf16.mxu0 0
    %629 = vmatpush1.bf16.msra.mxu0 %v529
    %630 = vmatprep.subr.bf16.mxu0 0
    %631 = vmatpush1.bf16.msra.mxu0 %v530
    %632 = vmatprep.subr.bf16.mxu0 0
    %633 = vmatpush1.bf16.msra.mxu0 %v531
    %634 = vmatprep.subr.bf16.mxu0 0
    %635 = vmatpush1.bf16.msra.mxu0 %v532
    %636 = vmatprep.subr.bf16.mxu0 0
    %637 = vmatpush1.bf16.msra.mxu0 %v533
    %638 = vmatprep.subr.bf16.mxu0 0
    %639 = vmatpush1.bf16.msra.mxu0 %v534
    %640 = vmatprep.subr.bf16.mxu0 0
    %641 = vmatpush1.bf16.msra.mxu0 %v535
    %642 = vmatprep.subr.bf16.mxu0 0
    %643 = vmatpush1.bf16.msra.mxu0 %v536
    %644 = vmatprep.subr.bf16.mxu0 0
    %645 = vmatpush1.bf16.msra.mxu0 %v537
    %646 = vmatprep.subr.bf16.mxu0 0
    %647 = vmatpush1.bf16.msra.mxu0 %v538
    %648 = vmatprep.subr.bf16.mxu0 0
    %649 = vmatpush1.bf16.msra.mxu0 %v539
    %650 = vmatprep.subr.bf16.mxu0 0
    %651 = vmatpush1.bf16.msra.mxu0 %v540
    %652 = vmatprep.subr.bf16.mxu0 0
    %653 = vmatpush1.bf16.msra.mxu0 %v541
    %654 = vmatprep.mubr.bf16.mxu0 %v142
    %655 = vmatmul.mubr.bf16.gmra.mrb[0].mxu0 %v141
    %v656 = vpop.f32.mrb[0].mxu0
    %v657 = vadd.f32 %v328, %v656
    %v658 = vpop.f32.mrb[0].mxu0
    %v659 = vpop.f32.mrb[0].mxu0
    %v660 = vadd.f32 %v331, %v659
    %v661 = vpop.f32.mrb[0].mxu0
    %662 = vdwg.mxu0
    %663 = vmatprep.subr.bf16.mxu0 0
    %664 = vmatpush1.bf16.msra.mxu0 %v542
    %665 = vmatprep.subr.bf16.mxu0 0
    %666 = vmatpush1.bf16.msra.mxu0 %v543
    %667 = vmatprep.subr.bf16.mxu0 0
    %668 = vmatpush1.bf16.msra.mxu0 %v544
    %669 = vmatprep.subr.bf16.mxu0 0
    %670 = vmatpush1.bf16.msra.mxu0 %v545
    %671 = vmatprep.subr.bf16.mxu0 0
    %672 = vmatpush1.bf16.msra.mxu0 %v546
    %673 = vmatprep.subr.bf16.mxu0 0
    %674 = vmatpush1.bf16.msra.mxu0 %v547
    %675 = vmatprep.subr.bf16.mxu0 0
    %676 = vmatpush1.bf16.msra.mxu0 %v548
    %677 = vmatprep.subr.bf16.mxu0 0
    %678 = vmatpush1.bf16.msra.mxu0 %v549
    %679 = vmatprep.subr.bf16.mxu0 0
    %680 = vmatpush1.bf16.msra.mxu0 %v550
    %681 = vmatprep.subr.bf16.mxu0 0
    %682 = vmatpush1.bf16.msra.mxu0 %v551
    %683 = vmatprep.subr.bf16.mxu0 0
    %684 = vmatpush1.bf16.msra.mxu0 %v552
    %685 = vmatprep.subr.bf16.mxu0 0
    %686 = vmatpush1.bf16.msra.mxu0 %v553
    %687 = vmatprep.subr.bf16.mxu0 0
    %688 = vmatpush1.bf16.msra.mxu0 %v554
    %689 = vmatprep.subr.bf16.mxu0 0
    %690 = vmatpush1.bf16.msra.mxu0 %v555
    %691 = vmatprep.subr.bf16.mxu0 0
    %692 = vmatpush1.bf16.msra.mxu0 %v556
    %693 = vmatprep.subr.bf16.mxu0 0
    %694 = vmatpush1.bf16.msra.mxu0 %v557
    %695 = vmatprep.mubr.bf16.mxu0 %v144
    %696 = vmatmul.mubr.bf16.gmra.mrb[0].mxu0 %v143
    %v697 = vpop.f32.mrb[0].mxu0
    %v698 = vadd.f32 %v657, %v697
    %v699 = vpop.f32.mrb[0].mxu0
    %v700 = vpop.f32.mrb[0].mxu0
    %v701 = vadd.f32 %v660, %v700
    %v702 = vpop.f32.mrb[0].mxu0
    %703 = vdwg.mxu0
    %704 = vmatprep.subr.bf16.mxu0 0
    %705 = vmatpush1.bf16.msra.mxu0 %v558
    %706 = vmatprep.subr.bf16.mxu0 0
    %707 = vmatpush1.bf16.msra.mxu0 %v559
    %708 = vmatprep.subr.bf16.mxu0 0
    %709 = vmatpush1.bf16.msra.mxu0 %v560
    %710 = vmatprep.subr.bf16.mxu0 0
    %711 = vmatpush1.bf16.msra.mxu0 %v561
    %712 = vmatprep.subr.bf16.mxu0 0
    %713 = vmatpush1.bf16.msra.mxu0 %v562
    %714 = vmatprep.subr.bf16.mxu0 0
    %715 = vmatpush1.bf16.msra.mxu0 %v563
    %716 = vmatprep.subr.bf16.mxu0 0
    %717 = vmatpush1.bf16.msra.mxu0 %v564
    %718 = vmatprep.subr.bf16.mxu0 0
    %719 = vmatpush1.bf16.msra.mxu0 %v565
    %720 = vmatprep.subr.bf16.mxu0 0
    %721 = vmatpush1.bf16.msra.mxu0 %v566
    %722 = vmatprep.subr.bf16.mxu0 0
    %723 = vmatpush1.bf16.msra.mxu0 %v567
    %724 = vmatprep.subr.bf16.mxu0 0
    %725 = vmatpush1.bf16.msra.mxu0 %v568
    %726 = vmatprep.subr.bf16.mxu0 0
    %727 = vmatpush1.bf16.msra.mxu0 %v569
    %728 = vmatprep.subr.bf16.mxu0 0
    %729 = vmatpush1.bf16.msra.mxu0 %v570
    %730 = vmatprep.subr.bf16.mxu0 0
    %731 = vmatpush1.bf16.msra.mxu0 %v571
    %732 = vmatprep.subr.bf16.mxu0 0
    %733 = vmatpush1.bf16.msra.mxu0 %v572
    %734 = vmatprep.subr.bf16.mxu0 0
    %735 = vmatpush1.bf16.msra.mxu0 %v573
    %736 = vmatprep.mubr.bf16.mxu0 %v146
    %737 = vmatmul.mubr.bf16.gmra.mrb[0].mxu0 %v145
    %v738 = vpop.f32.mrb[0].mxu0
    %v739 = vadd.f32 %v698, %v738
    %v740 = vpop.f32.mrb[0].mxu0
    %v741 = vpop.f32.mrb[0].mxu0
    %v742 = vadd.f32 %v701, %v741
    %v743 = vpop.f32.mrb[0].mxu0
    %744 = vdwg.mxu0
    %v745 = vld [vmem:[#allocation7] sm:$0xff]
    %v746 = vld [vmem:[#allocation7 + $0x8] sm:$0xff]
    %v747 = vpack.c.bf16 %v746, %v745
    %v748 = vld [vmem:[#allocation11] sm:$0xf]
    %v749 = vld [vmem:[#allocation11 + $0x4] sm:$0xf]
    %v750 = vld [vmem:[#allocation11 + $0x8] sm:$0xf]
    %v751 = vld [vmem:[#allocation11 + $0xc] sm:$0xf]
    %v752 = vld [vmem:[#allocation11 + $0x10] sm:$0xf]
    %v753 = vld [vmem:[#allocation11 + $0x14] sm:$0xf]
    %v754 = vld [vmem:[#allocation11 + $0x18] sm:$0xf]
    %v755 = vld [vmem:[#allocation11 + $0x1c] sm:$0xf]
    %v756 = vld [vmem:[#allocation11 + $0x20] sm:$0xf]
    %v757 = vld [vmem:[#allocation11 + $0x24] sm:$0xf]
    %v758 = vld [vmem:[#allocation11 + $0x28] sm:$0xf]
    %v759 = vld [vmem:[#allocation11 + $0x2c] sm:$0xf]
    %v760 = vld [vmem:[#allocation11 + $0x30] sm:$0xf]
    %v761 = vld [vmem:[#allocation11 + $0x34] sm:$0xf]
    %v762 = vld [vmem:[#allocation11 + $0x38] sm:$0xf]
    %v763 = vld [vmem:[#allocation11 + $0x3c] sm:$0xf]
    %v780 = vunpack.c.l.b16 %v748
    %v781 = vunpack.c.l.b16 %v749
    %v782 = vunpack.c.l.b16 %v750
    %v783 = vunpack.c.l.b16 %v751
    %v784 = vunpack.c.l.b16 %v752
    %v785 = vunpack.c.l.b16 %v753
    %v786 = vunpack.c.l.b16 %v754
    %v787 = vunpack.c.l.b16 %v755
    %v788 = vunpack.c.l.b16 %v756
    %v789 = vunpack.c.l.b16 %v757
    %v790 = vunpack.c.l.b16 %v758
    %v791 = vunpack.c.l.b16 %v759
    %v792 = vunpack.c.l.b16 %v760
    %v793 = vunpack.c.l.b16 %v761
    %v794 = vunpack.c.l.b16 %v762
    %v795 = vunpack.c.l.b16 %v763
    %v796 = vpack.c.b16 %v781, %v780
    %v797 = vpack.c.b16 %v783, %v782
    %v798 = vpack.c.b16 %v785, %v784
    %v799 = vpack.c.b16 %v787, %v786
    %v800 = vpack.c.b16 %v789, %v788
    %v801 = vpack.c.b16 %v791, %v790
    %v802 = vpack.c.b16 %v793, %v792
    %v803 = vpack.c.b16 %v795, %v794
    %812 = vmatprep.subr.bf16.mxu0 0
    %813 = vmatpush1.bf16.msra.mxu0 %v796
    %814 = vmatprep.subr.bf16.mxu0 0
    %815 = vmatpush1.bf16.msra.mxu0 %v797
    %816 = vmatprep.subr.bf16.mxu0 0
    %817 = vmatpush1.bf16.msra.mxu0 %v798
    %818 = vmatprep.subr.bf16.mxu0 0
    %819 = vmatpush1.bf16.msra.mxu0 %v799
    %820 = vmatprep.subr.bf16.mxu0 0
    %821 = vmatpush1.bf16.msra.mxu0 %v800
    %822 = vmatprep.subr.bf16.mxu0 0
    %823 = vmatpush1.bf16.msra.mxu0 %v801
    %824 = vmatprep.subr.bf16.mxu0 0
    %825 = vmatpush1.bf16.msra.mxu0 %v802
    %826 = vmatprep.subr.bf16.mxu0 0
    %827 = vmatpush1.bf16.msra.mxu0 %v803
    %828 = vmatprep.subr.bf16.mxu0 0
    %829 = vmatpush1.bf16.msra.mxu0 0
    %830 = vmatprep.subr.bf16.mxu0 0
    %831 = vmatpush1.bf16.msra.mxu0 0
    %832 = vmatprep.subr.bf16.mxu0 0
    %833 = vmatpush1.bf16.msra.mxu0 0
    %834 = vmatprep.subr.bf16.mxu0 0
    %835 = vmatpush1.bf16.msra.mxu0 0
    %836 = vmatprep.subr.bf16.mxu0 0
    %837 = vmatpush1.bf16.msra.mxu0 0
    %838 = vmatprep.subr.bf16.mxu0 0
    %839 = vmatpush1.bf16.msra.mxu0 0
    %840 = vmatprep.subr.bf16.mxu0 0
    %841 = vmatpush1.bf16.msra.mxu0 0
    %842 = vmatprep.subr.bf16.mxu0 0
    %843 = vmatpush1.bf16.msra.mxu0 0
    %844 = vmatprep.mubr.bf16.mxu0 0
    %845 = vmatmul.mubr.bf16.gmra.mrb[0].mxu0 %v747
    %v846 = vpop.f32.mrb[0].mxu0
    %v847 = vadd.f32 0.0, %v846
    %v848 = vpop.f32.mrb[0].mxu0
    %v849 = vpop.f32.mrb[0].mxu0
    %v850 = vadd.f32 0.0, %v849
    %v851 = vpop.f32.mrb[0].mxu0
    %852 = vdwg.mxu0
    %v853 = vadd.f32 %v739, %v847
    %v854 = vadd.f32 %v742, %v850
    %v855 = vld [vmem:[%s6] sm:$0x1]
    %v857 = vlaneseq
    %v858 = vshrl.u32 %v857, 7
    %v859 = vsub.s32 0, %v858
    %v860 = vrot.slane %v855, %v859
    %v862 = vadd.f32 %v853, %v860
    %v863 = vadd.f32 %v854, %v860
    %v864 = vtanh.pop %v862
    %v865 = vtanh.pop %v863
    %v866 = vpack.c.bf16 %v865, %v864
    %v867 = vld [vmem:[#allocation13] sm:$0xf]
    %v868 = vld [vmem:[#allocation13 + $0x4] sm:$0xf]
    %v869 = vld [vmem:[#allocation13 + $0x8] sm:$0xf]
    %v870 = vld [vmem:[#allocation13 + $0xc] sm:$0xf]
    %v871 = vld [vmem:[#allocation13 + $0x10] sm:$0xf]
    %v872 = vld [vmem:[#allocation13 + $0x14] sm:$0xf]
    %v873 = vld [vmem:[#allocation13 + $0x18] sm:$0xf]
    %v874 = vld [vmem:[#allocation13 + $0x1c] sm:$0xf]
    %v875 = vld [vmem:[#allocation13 + $0x20] sm:$0xf]
    %v876 = vld [vmem:[#allocation13 + $0x24] sm:$0xf]
    %v877 = vld [vmem:[#allocation13 + $0x28] sm:$0xf]
    %v878 = vld [vmem:[#allocation13 + $0x2c] sm:$0xf]
    %v879 = vld [vmem:[#allocation13 + $0x30] sm:$0xf]
    %v880 = vld [vmem:[#allocation13 + $0x34] sm:$0xf]
    %v881 = vld [vmem:[#allocation13 + $0x38] sm:$0xf]
    %v882 = vld [vmem:[#allocation13 + $0x3c] sm:$0xf]
    %v883 = vld [vmem:[%s8] sm:$0x1]
    %v885 = vlaneseq
    %v886 = vshrl.u32 %v885, 7
    %v887 = vsub.s32 0, %v886
    %v888 = vrot.slane %v883, %v887
    %v906 = vunpack.c.l.b16 %v867
    %v907 = vunpack.c.l.b16 %v868
    %v908 = vunpack.c.l.b16 %v869
    %v909 = vunpack.c.l.b16 %v870
    %v910 = vunpack.c.l.b16 %v871
    %v911 = vunpack.c.l.b16 %v872
    %v912 = vunpack.c.l.b16 %v873
    %v913 = vunpack.c.l.b16 %v874
    %v914 = vunpack.c.l.b16 %v875
    %v915 = vunpack.c.l.b16 %v876
    %v916 = vunpack.c.l.b16 %v877
    %v917 = vunpack.c.l.b16 %v878
    %v918 = vunpack.c.l.b16 %v879
    %v919 = vunpack.c.l.b16 %v880
    %v920 = vunpack.c.l.b16 %v881
    %v921 = vunpack.c.l.b16 %v882
    %v922 = vpack.c.b16 %v907, %v906
    %v923 = vpack.c.b16 %v909, %v908
    %v924 = vpack.c.b16 %v911, %v910
    %v925 = vpack.c.b16 %v913, %v912
    %v926 = vpack.c.b16 %v915, %v914
    %v927 = vpack.c.b16 %v917, %v916
    %v928 = vpack.c.b16 %v919, %v918
    %v929 = vpack.c.b16 %v921, %v920
    %938 = vmatprep.subr.bf16.mxu0 0
    %939 = vmatpush1.bf16.msra.mxu0 %v922
    %940 = vmatprep.subr.bf16.mxu0 0
    %941 = vmatpush1.bf16.msra.mxu0 %v923
    %942 = vmatprep.subr.bf16.mxu0 0
    %943 = vmatpush1.bf16.msra.mxu0 %v924
    %944 = vmatprep.subr.bf16.mxu0 0
    %945 = vmatpush1.bf16.msra.mxu0 %v925
    %946 = vmatprep.subr.bf16.mxu0 0
    %947 = vmatpush1.bf16.msra.mxu0 %v926
    %948 = vmatprep.subr.bf16.mxu0 0
    %949 = vmatpush1.bf16.msra.mxu0 %v927
    %950 = vmatprep.subr.bf16.mxu0 0
    %951 = vmatpush1.bf16.msra.mxu0 %v928
    %952 = vmatprep.subr.bf16.mxu0 0
    %953 = vmatpush1.bf16.msra.mxu0 %v929
    %954 = vmatprep.subr.bf16.mxu0 0
    %955 = vmatpush1.bf16.msra.mxu0 0
    %956 = vmatprep.subr.bf16.mxu0 0
    %957 = vmatpush1.bf16.msra.mxu0 0
    %958 = vmatprep.subr.bf16.mxu0 0
    %959 = vmatpush1.bf16.msra.mxu0 0
    %960 = vmatprep.subr.bf16.mxu0 0
    %961 = vmatpush1.bf16.msra.mxu0 0
    %962 = vmatprep.subr.bf16.mxu0 0
    %963 = vmatpush1.bf16.msra.mxu0 0
    %964 = vmatprep.subr.bf16.mxu0 0
    %965 = vmatpush1.bf16.msra.mxu0 0
    %966 = vmatprep.subr.bf16.mxu0 0
    %967 = vmatpush1.bf16.msra.mxu0 0
    %968 = vmatprep.subr.bf16.mxu0 0
    %969 = vmatpush1.bf16.msra.mxu0 0
    %970 = vmatprep.mubr.bf16.mxu0 0
    %971 = vmatmul.mubr.bf16.gmra.mrb[0].mxu0 %v866
    %v972 = vpop.f32.mrb[0].mxu0
    %v973 = vadd.f32 %v888, %v972
    %v974 = vpop.f32.mrb[0].mxu0
    %v975 = vpop.f32.mrb[0].mxu0
    %v976 = vadd.f32 %v888, %v975
    %v977 = vpop.f32.mrb[0].mxu0
    %978 = vdwg.mxu0
    %979 = vst [vmem:[#allocation14] sm:$0xff] %v973
    %980 = vst [vmem:[#allocation14 + $0x8] sm:$0xff] %v976
    // Predicated region
    $region66: #{tpu_custom_call.1} parent=1 // pred_check
      _
    $region67: #{tpu_custom_call.1} parent=1 // pred_check_branch
      %982 = sbr.rel (0) target = $region69
    $region68: #{tpu_custom_call.1} parent=1 // pred_region
      %s984 = ssub.s32 256, 256
      %985 = vsyncadd [#allocation4], %s984
      %s986 = sshll.u32 [#allocation14], 4
      %s987 = int_to_ptr.vmem [resolvable:$true] %s986
      %992 = dma.vmem_to_hbm [thread:$0]  %s987, 256, %s9, [#allocation4], 128, 128, 8
    $region69: #{tpu_custom_call.1} parent=1 // pred_fallthru
      _
    // Predicated region
    $region70: #{tpu_custom_call.1} parent=1 // pred_check
      _
    $region71: #{tpu_custom_call.1} parent=1 // pred_check_branch
      %994 = sbr.rel (0) target = $region73
    $region72: #{tpu_custom_call.1} parent=1 // pred_region
      %995 = dma.done [#allocation4], 256
    $region73: #{tpu_custom_call.1} parent=1 // pred_fallthru
      _
    %996 = vsyncpa [#allocation3], 1
    %997 = vsyncpa [#allocation6], 1
    %998 = vsyncpa [#allocation9], 1
    %999 = vsyncpa [#allocation12], 1
    %1000 = vsyncpa [#allocation4], 1

</llo_original>
